<compile_context>
chip_gen: v7x
topology: tpu7x:2x2x1
jax: 0.10.0
libtpu: 0.0.40
codegen_flags: <defaults>
</compile_context>

<pallas_src>
import math
import functools

import numpy as np
import jax
import jax.numpy as jnp
from jax.experimental import pallas as pl
from jax.experimental.pallas import tpu as pltpu


# ----------------------------------------------------------------------------
# Filter construction (deterministic parameter setup, plain numpy "glue").
# Matches torch.kaiser_window(periodic=False) + torch.sinc semantics.
# ----------------------------------------------------------------------------
def kaiser_sinc_filter1d(cutoff, half_width, kernel_size):
    even = kernel_size % 2 == 0
    half_size = kernel_size // 2
    delta_f = 4 * half_width
    A = 2.285 * (half_size - 1) * math.pi * delta_f + 7.95
    if A > 50.0:
        beta = 0.1102 * (A - 8.7)
    elif A >= 21.0:
        beta = 0.5842 * (A - 21) ** 0.4 + 0.07886 * (A - 21.0)
    else:
        beta = 0.0

    n = np.arange(kernel_size, dtype=np.float64)
    if kernel_size == 1:
        window = np.ones(1, dtype=np.float64)
    else:
        alpha = (kernel_size - 1) / 2.0
        window = np.i0(beta * np.sqrt(1.0 - ((n - alpha) / alpha) ** 2)) / np.i0(beta)

    if even:
        time = np.arange(-half_size, half_size, dtype=np.float64) + 0.5
    else:
        time = np.arange(kernel_size, dtype=np.float64) - half_size

    if cutoff == 0:
        filt = np.zeros_like(time)
    else:
        filt = 2 * cutoff * window * np.sinc(2 * cutoff * time)  # np.sinc == torch.sinc
        filt = filt / filt.sum()
    return filt  # (kernel_size,) float64


def _round_up(v, m):
    return ((v + m - 1) // m) * m


# ----------------------------------------------------------------------------
# Pallas kernel: depthwise polyphase MAC on one (RB, TO) output tile.
# ----------------------------------------------------------------------------
def _downsample_kernel(xm_ref, xh_ref, o_ref, *, w, taps, stride, t_out):
    # xm_ref : (stride, RB, TO)   polyphase main tile           (VMEM)
    # xh_ref : (stride, RB, 128)  next 128 polyphase columns    (VMEM, right halo)
    # o_ref  : (RB, TO)           output tile                   (VMEM)
    acc = jnp.zeros(o_ref.shape, jnp.float32)
    for p in range(stride):
        # (RB, TO + 128) window; taps look ahead by at most taps-1 (< 128) lanes.
        win = jnp.concatenate([xm_ref[p], xh_ref[p]], axis=-1)
        for j in range(taps):
            c = w[j][p]                       # python float, folded at trace time
            if c != 0.0:
                acc = acc + c * win[:, j:j + t_out]
    o_ref[...] = acc.astype(o_ref.dtype)      # single lane-dense store per tile


# ----------------------------------------------------------------------------
# Wrapper: layout plumbing + pallas_call with a gridded, pipelined BlockSpec.
# ----------------------------------------------------------------------------
def downsample1d(x, ratio=2, kernel_size=None, *, time_tile=2048, row_tile=64):
    B, C, T = x.shape
    stride = int(ratio)
    K = int(6 * ratio // 2) * 2 if kernel_size is None else int(kernel_size)
    filt = kaiser_sinc_filter1d(0.5 / ratio, 0.6 / ratio, K)

    pad_left = (K // 2 - int(K % 2 == 0)) + (K // 2)   # == K - 1 (causal zero pad)
    T_out = (T + pad_left - K) // stride + 1

    taps = -(-K // stride)                              # ceil(K / stride)
    assert taps - 1 <= 128, "halo BlockSpec assumes the filter spans <= 129 output taps"

    # ---- tiling --------------------------------------------------------------
    R = B * C
    R_pad = _round_up(R, 8)
    RB = 8
    for cand in (256, 128, 64, 32, 16, 8):
        if cand <= row_tile and R_pad % cand == 0:
            RB = cand
            break

    TO = min(int(time_tile), _round_up(T_out, 128))
    TO = _round_up(TO, 128)
    NT = -(-T_out // TO)
    T_out_pad = NT * TO
    Mp = T_out_pad + 128          # polyphase length incl. halo room; multiple of 128

    # ---- polyphase input, built in one fused XLA pass ------------------------
    x2 = x.reshape(R, T).astype(jnp.float32)
    right_pad = Mp * stride - pad_left - T
    x_padded = jnp.pad(x2, ((0, R_pad - R), (pad_left, right_pad)))
    # x_ph[p, r, m] = x_padded[r, m*stride + p]
    x_ph = x_padded.reshape(R_pad, Mp, stride).transpose(2, 0, 1)

    # ---- filter taps folded per phase, baked as python constants -------------
    w_flat = np.zeros(taps * stride, dtype=np.float64)
    w_flat[:K] = filt
    w = tuple(tuple(float(w_flat[j * stride + p]) for p in range(stride))
              for j in range(taps))

    kernel = functools.partial(_downsample_kernel, w=w, taps=taps,
                               stride=stride, t_out=TO)

    halo_blocks_per_tile = TO // 128
    cost = pl.CostEstimate(
        flops=2 * K * R * T_out,
        transcendentals=0,
        bytes_accessed=int(x_ph.size) * 4 + int(R_pad * T_out_pad) * 4,
    )

    out_padded = pl.pallas_call(
        kernel,
        out_shape=jax.ShapeDtypeStruct((R_pad, T_out_pad), jnp.float32),
        grid=(R_pad // RB, NT),
        in_specs=[
            # main polyphase tile
            pl.BlockSpec((stride, RB, TO), lambda i, j: (0, i, j)),
            # 128-lane right halo (next polyphase block of the same array)
            pl.BlockSpec((stride, RB, 128),
                         lambda i, j: (0, i, (j + 1) * halo_blocks_per_tile)),
        ],
        out_specs=pl.BlockSpec((RB, TO), lambda i, j: (i, j)),
        compiler_params=pltpu.CompilerParams(
            dimension_semantics=("parallel", "parallel")),
        cost_estimate=cost,
    )(x_ph, x_ph)

    # Identity slices (no copy) whenever R % 8 == 0 and T_out % TO == 0.
    out = out_padded[:R, :T_out].reshape(B, C, T_out)
    return out.astype(x.dtype)


# ----------------------------------------------------------------------------
# Pure-JAX reference (same math, no Pallas) for the correctness check.
# ----------------------------------------------------------------------------
def _reference(x, ratio=2, kernel_size=None):
    B, C, T = x.shape
    K = int(6 * ratio // 2) * 2 if kernel_size is None else int(kernel_size)
    stride = int(ratio)
    filt = jnp.asarray(kaiser_sinc_filter1d(0.5 / ratio, 0.6 / ratio, K),
                       dtype=jnp.float32)
    pad_left = (K // 2 - int(K % 2 == 0)) + (K // 2)
    x_pad = jnp.pad(x.astype(jnp.float32), ((0, 0), (0, 0), (pad_left, 0)))
    T_out = (T + pad_left - K) // stride + 1
    out = jnp.zeros((B, C, T_out), jnp.float32)
    for k in range(K):
        out = out + filt[k] * x_pad[:, :, k:k + stride * (T_out - 1) + 1:stride]
    return out


if __name__ == "__main__":
    k0, k1 = jax.random.split(jax.random.PRNGKey(0))

    # primary small test (module's NCL convention)
    B, C, T = 2, 4, 16
    x = jax.random.normal(k0, (B, C, T), dtype=jnp.float32)
    y = jax.block_until_ready(downsample1d(x, ratio=2))
    y_ref = _reference(x, ratio=2)
    assert y.shape == (B, C, (T + 11 - 12) // 2 + 1), y.shape
    assert jnp.allclose(y, y_ref, rtol=1e-5, atol=1e-5), "mismatch vs reference (small)"

    # second shape exercising the multi-tile / halo / ragged-output path
    B2, C2, T2 = 2, 8, 2300
    x2 = jax.random.normal(k1, (B2, C2, T2), dtype=jnp.float32)
    y2 = jax.block_until_ready(downsample1d(x2, ratio=2, time_tile=1024))
    y2_ref = _reference(x2, ratio=2)
    assert y2.shape == y2_ref.shape, (y2.shape, y2_ref.shape)
    assert jnp.allclose(y2, y2_ref, rtol=1e-5, atol=1e-5), "mismatch vs reference (tiled)"

    print("KERNEL_OK")
</pallas_src>

<mosaic_0001>
module attributes {stable_mosaic.version = 11 : i64} {
  func.func @_downsample_kernel(%arg0: i32, %arg1: i32, %arg2: memref<2x8x128xf32, #tpu.memory_space<vmem>>, %arg3: memref<2x8x128xf32, #tpu.memory_space<vmem>>, %arg4: memref<8x128xf32, #tpu.memory_space<vmem>>) attributes {dimension_semantics = [#tpu.dimension_semantics<parallel>, #tpu.dimension_semantics<parallel>], iteration_bounds = array<i64: 1, 1>, scalar_prefetch = 0 : i64, scratch_operands = 0 : i64, tpu.core_type = #tpu.core_type<tc>, window_params = [{transform_indices = @transform_0, window_bounds = array<i64: 2, 8, 128>}, {transform_indices = @transform_1, window_bounds = array<i64: 2, 8, 128>}, {transform_indices = @transform_2, window_bounds = array<i64: 8, 128>}]} {
    %cst = arith.constant 0.000000e+00 : f32
    %0 = vector.broadcast %cst : f32 to vector<8x128xf32>
    %c0 = arith.constant 0 : index
    %c0_0 = arith.constant 0 : index
    %c0_1 = arith.constant 0 : index
    %1 = vector.load %arg2[%c0, %c0_0, %c0_1] : memref<2x8x128xf32, #tpu.memory_space<vmem>>, vector<1x8x128xf32>
    %2 = vector.shape_cast %1 : vector<1x8x128xf32> to vector<8x128xf32>
    %c0_2 = arith.constant 0 : index
    %c0_3 = arith.constant 0 : index
    %c0_4 = arith.constant 0 : index
    %3 = vector.load %arg3[%c0_2, %c0_3, %c0_4] : memref<2x8x128xf32, #tpu.memory_space<vmem>>, vector<1x8x128xf32>
    %4 = vector.shape_cast %3 : vector<1x8x128xf32> to vector<8x128xf32>
    %5 = tpu.concatenate %2, %4 in 1 : vector<8x128xf32>, vector<8x128xf32> -> vector<8x256xf32>
    %6 = vector.extract_strided_slice %5 {offsets = [0, 0], sizes = [8, 128], strides = [1, 1]} : vector<8x256xf32> to vector<8x128xf32>
    %cst_5 = arith.constant 0.00202896656 : f32
    %7 = vector.broadcast %cst_5 : f32 to vector<8x128xf32>
    %8 = arith.mulf %7, %6 : vector<8x128xf32>
    %9 = arith.addf %0, %8 : vector<8x128xf32>
    %10 = vector.extract_strided_slice %5 {offsets = [0, 1], sizes = [8, 128], strides = [1, 1]} : vector<8x256xf32> to vector<8x128xf32>
    %cst_6 = arith.constant -0.0255434643 : f32
    %11 = vector.broadcast %cst_6 : f32 to vector<8x128xf32>
    %12 = arith.mulf %11, %10 : vector<8x128xf32>
    %13 = arith.addf %9, %12 : vector<8x128xf32>
    %14 = vector.extract_strided_slice %5 {offsets = [0, 2], sizes = [8, 128], strides = [1, 1]} : vector<8x256xf32> to vector<8x128xf32>
    %cst_7 = arith.constant 0.128572613 : f32
    %15 = vector.broadcast %cst_7 : f32 to vector<8x128xf32>
    %16 = arith.mulf %15, %14 : vector<8x128xf32>
    %17 = arith.addf %13, %16 : vector<8x128xf32>
    %18 = vector.extract_strided_slice %5 {offsets = [0, 3], sizes = [8, 128], strides = [1, 1]} : vector<8x256xf32> to vector<8x128xf32>
    %cst_8 = arith.constant 0.443209797 : f32
    %19 = vector.broadcast %cst_8 : f32 to vector<8x128xf32>
    %20 = arith.mulf %19, %18 : vector<8x128xf32>
    %21 = arith.addf %17, %20 : vector<8x128xf32>
    %22 = vector.extract_strided_slice %5 {offsets = [0, 4], sizes = [8, 128], strides = [1, 1]} : vector<8x256xf32> to vector<8x128xf32>
    %cst_9 = arith.constant -0.0576573759 : f32
    %23 = vector.broadcast %cst_9 : f32 to vector<8x128xf32>
    %24 = arith.mulf %23, %22 : vector<8x128xf32>
    %25 = arith.addf %21, %24 : vector<8x128xf32>
    %26 = vector.extract_strided_slice %5 {offsets = [0, 5], sizes = [8, 128], strides = [1, 1]} : vector<8x256xf32> to vector<8x128xf32>
    %cst_10 = arith.constant 0.00938946381 : f32
    %27 = vector.broadcast %cst_10 : f32 to vector<8x128xf32>
    %28 = arith.mulf %27, %26 : vector<8x128xf32>
    %29 = arith.addf %25, %28 : vector<8x128xf32>
    %c1 = arith.constant 1 : index
    %c0_11 = arith.constant 0 : index
    %c0_12 = arith.constant 0 : index
    %30 = vector.load %arg2[%c1, %c0_11, %c0_12] : memref<2x8x128xf32, #tpu.memory_space<vmem>>, vector<1x8x128xf32>
    %31 = vector.shape_cast %30 : vector<1x8x128xf32> to vector<8x128xf32>
    %c1_13 = arith.constant 1 : index
    %c0_14 = arith.constant 0 : index
    %c0_15 = arith.constant 0 : index
    %32 = vector.load %arg3[%c1_13, %c0_14, %c0_15] : memref<2x8x128xf32, #tpu.memory_space<vmem>>, vector<1x8x128xf32>
    %33 = vector.shape_cast %32 : vector<1x8x128xf32> to vector<8x128xf32>
    %34 = tpu.concatenate %31, %33 in 1 : vector<8x128xf32>, vector<8x128xf32> -> vector<8x256xf32>
    %35 = vector.extract_strided_slice %34 {offsets = [0, 0], sizes = [8, 128], strides = [1, 1]} : vector<8x256xf32> to vector<8x128xf32>
    %cst_16 = arith.constant 0.00938946381 : f32
    %36 = vector.broadcast %cst_16 : f32 to vector<8x128xf32>
    %37 = arith.mulf %36, %35 : vector<8x128xf32>
    %38 = arith.addf %29, %37 : vector<8x128xf32>
    %39 = vector.extract_strided_slice %34 {offsets = [0, 1], sizes = [8, 128], strides = [1, 1]} : vector<8x256xf32> to vector<8x128xf32>
    %cst_17 = arith.constant -0.0576573759 : f32
    %40 = vector.broadcast %cst_17 : f32 to vector<8x128xf32>
    %41 = arith.mulf %40, %39 : vector<8x128xf32>
    %42 = arith.addf %38, %41 : vector<8x128xf32>
    %43 = vector.extract_strided_slice %34 {offsets = [0, 2], sizes = [8, 128], strides = [1, 1]} : vector<8x256xf32> to vector<8x128xf32>
    %cst_18 = arith.constant 0.443209797 : f32
    %44 = vector.broadcast %cst_18 : f32 to vector<8x128xf32>
    %45 = arith.mulf %44, %43 : vector<8x128xf32>
    %46 = arith.addf %42, %45 : vector<8x128xf32>
    %47 = vector.extract_strided_slice %34 {offsets = [0, 3], sizes = [8, 128], strides = [1, 1]} : vector<8x256xf32> to vector<8x128xf32>
    %cst_19 = arith.constant 0.128572613 : f32
    %48 = vector.broadcast %cst_19 : f32 to vector<8x128xf32>
    %49 = arith.mulf %48, %47 : vector<8x128xf32>
    %50 = arith.addf %46, %49 : vector<8x128xf32>
    %51 = vector.extract_strided_slice %34 {offsets = [0, 4], sizes = [8, 128], strides = [1, 1]} : vector<8x256xf32> to vector<8x128xf32>
    %cst_20 = arith.constant -0.0255434643 : f32
    %52 = vector.broadcast %cst_20 : f32 to vector<8x128xf32>
    %53 = arith.mulf %52, %51 : vector<8x128xf32>
    %54 = arith.addf %50, %53 : vector<8x128xf32>
    %55 = vector.extract_strided_slice %34 {offsets = [0, 5], sizes = [8, 128], strides = [1, 1]} : vector<8x256xf32> to vector<8x128xf32>
    %cst_21 = arith.constant 0.00202896656 : f32
    %56 = vector.broadcast %cst_21 : f32 to vector<8x128xf32>
    %57 = arith.mulf %56, %55 : vector<8x128xf32>
    %58 = arith.addf %54, %57 : vector<8x128xf32>
    %c0_22 = arith.constant 0 : index
    %c0_23 = arith.constant 0 : index
    %59 = vector.load %arg4[%c0_22, %c0_23] : memref<8x128xf32, #tpu.memory_space<vmem>>, vector<8x128xf32>
    tpu.vector_store %arg4[%c0_22, %c0_23], %58 {strides = array<i32>} : memref<8x128xf32, #tpu.memory_space<vmem>>, vector<8x128xf32>,
    return
  }
  func.func @transform_0(%arg0: i32, %arg1: i32) -> (i32, i32, i32) {
    %c0_i32 = arith.constant 0 : i32
    %c0_i32_0 = arith.constant 0 : i32
    return %c0_i32, %arg0, %arg1 : i32, i32, i32
  }
  func.func @transform_1(%arg0: i32, %arg1: i32) -> (i32, i32, i32) {
    %c1_i32 = arith.constant 1 : i32
    %0 = arith.addi %arg1, %c1_i32 : i32
    %c1_i32_0 = arith.constant 1 : i32
    %1 = arith.muli %0, %c1_i32_0 : i32
    %c0_i32 = arith.constant 0 : i32
    %c0_i32_1 = arith.constant 0 : i32
    return %c0_i32, %arg0, %1 : i32, i32, i32
  }
  func.func @transform_2(%arg0: i32, %arg1: i32) -> (i32, i32) {
    %c0_i32 = arith.constant 0 : i32
    return %arg0, %arg1 : i32, i32
  }
}

</mosaic_0001>

<llo_original>
// kernel: tpu_custom_call.1
$region0: #{tpu_custom_call.1}
  #allocation0 [shape = 'u32[]', space=smem, size = 0x4, offset = 0x4, fixed_abs, tag = 'smem constant byte address 0x4 - core index']
  #allocation1 [shape = 'u32[144,128]{1,0:T(1,128)}', space=vmem, size = 0x12000, scoped, tag = 'internal scratch']
  %s0 = inlined_call_operand.hbm [shape: f32[2,8,256], index: 0, kind: input, shape index: {}]
  %s1 = inlined_call_operand.hbm [shape: f32[2,8,256], index: 1, kind: input, shape index: {}]
  %s2 = inlined_call_operand.hbm [shape: f32[8,128], index: 2, kind: output, shape index: {}]
  %s3 = sld [smem:[#allocation0]]
  $region26: #{tpu_custom_call.1} parent=0
    _
  %s5 = ssub.s32 1, %s3
  %s6 = scalar_select 0, %s5, %s3
  $region1: #{tpu_custom_call.1} parent=0
    #allocation2 [shape = 'u8[8192]{0}', space=vmem, size = 0x2000, scoped, tag = 'input window, operand 0, single buffered']
    #allocation3 [shape = 's32[1]{0}', space=sflag, size = 0x4, scoped, tag = 'scoped memory for tpu_custom_call.1']
    #allocation4 [shape = 's32[1]{0}', space=sflag, size = 0x4, scoped, tag = 'scoped memory for tpu_custom_call.1']
    #allocation5 [shape = 'u8[8192]{0}', space=vmem, size = 0x2000, scoped, tag = 'input window, operand 1, single buffered']
    #allocation6 [shape = 's32[1]{0}', space=sflag, size = 0x4, scoped, tag = 'scoped memory for tpu_custom_call.1']
    #allocation7 [shape = 'u8[4096]{0}', space=vmem, size = 0x1000, scoped, tag = 'output window, operand 0, single buffered']
    %7 = vsyncpa [#allocation3], 0
    %8 = vsyncpa [#allocation6], 0
    %9 = vsyncpa [#allocation4], 0
    // Predicated region
    $region2: #{tpu_custom_call.1} parent=1 // pred_check
      _
    $region3: #{tpu_custom_call.1} parent=1 // pred_check_branch
      %11 = sbr.rel (0) target = $region5
    $region4: #{tpu_custom_call.1} parent=1 // pred_region
      %s13 = ssub.s32 256, 256
      %14 = vsyncadd [#allocation3], %s13
      %s15 = sshll.u32 [#allocation2], 4
      %s16 = int_to_ptr.vmem [resolvable:$true] %s15
      %21 = dma.hbm_to_vmem [thread:$0]  %s0, 256, %s16, [#allocation3], 256, 128, 8
    $region5: #{tpu_custom_call.1} parent=1 // pred_fallthru
      _
    // Predicated region
    $region6: #{tpu_custom_call.1} parent=1 // pred_check
      _
    $region7: #{tpu_custom_call.1} parent=1 // pred_check_branch
      %23 = sbr.rel (0) target = $region9
    $region8: #{tpu_custom_call.1} parent=1 // pred_region
      %s24 = sadd.s32 0, 1
      %s26 = ssub.s32 256, 256
      %27 = vsyncadd [#allocation6], %s26
      %s28 = smul.addr %s24, 128
      %s29 = scalar_lea.hbm %s1, %s28
      %s30 = sshll.u32 [#allocation5], 4
      %s31 = int_to_ptr.vmem [resolvable:$true] %s30
      %36 = dma.hbm_to_vmem [thread:$0]  %s29, 256, %s31, [#allocation6], 256, 128, 8
    $region9: #{tpu_custom_call.1} parent=1 // pred_fallthru
      _
    // Predicated region
    $region10: #{tpu_custom_call.1} parent=1 // pred_check
      _
    $region11: #{tpu_custom_call.1} parent=1 // pred_check_branch
      %38 = sbr.rel (0) target = $region13
    $region12: #{tpu_custom_call.1} parent=1 // pred_region
      %39 = dma.done [#allocation3], 256
    $region13: #{tpu_custom_call.1} parent=1 // pred_fallthru
      _
    // Predicated region
    $region14: #{tpu_custom_call.1} parent=1 // pred_check
      _
    $region15: #{tpu_custom_call.1} parent=1 // pred_check_branch
      %41 = sbr.rel (0) target = $region17
    $region16: #{tpu_custom_call.1} parent=1 // pred_region
      %42 = dma.done [#allocation6], 256
    $region17: #{tpu_custom_call.1} parent=1 // pred_fallthru
      _
    %s43 = sadd.s32 0, 1
    %v44 = vld [vmem:[#allocation2] sm:$0xff]
    %v45 = vld [vmem:[#allocation5] sm:$0xff]
    %v46 = vmul.f32 %v44, 0.0020289666
    %v47 = vadd.f32 %v46, 0.0
    %v48 = vmul.f32 %v44, -0.025543464
    %v49 = vmul.f32 %v45, -0.025543464
    %52 = vrot.lane.b32.xlu0 %v48, 127
    %v53 = vpop.permute.xlu0 %52
    %54 = vrot.lane.b32.xlu0 %v49, 127
    %v55 = vpop.permute.xlu0 %54
    %vm56 = vcmask 1039360
    %v57 = vsel %vm56, %v53, %v55
    %v59 = vadd.f32 %v47, %v57
    %v60 = vmul.f32 %v44, 0.12857261
    %v61 = vmul.f32 %v45, 0.12857261
    %64 = vrot.lane.b32.xlu0 %v60, 126
    %v65 = vpop.permute.xlu0 %64
    %66 = vrot.lane.b32.xlu0 %v61, 126
    %v67 = vpop.permute.xlu0 %66
    %vm68 = vcmask 1031168
    %v69 = vsel %vm68, %v65, %v67
    %v71 = vadd.f32 %v59, %v69
    %v72 = vmul.f32 %v44, 0.4432098
    %v73 = vmul.f32 %v45, 0.4432098
    %76 = vrot.lane.b32.xlu0 %v72, 125
    %v77 = vpop.permute.xlu0 %76
    %78 = vrot.lane.b32.xlu0 %v73, 125
    %v79 = vpop.permute.xlu0 %78
    %vm80 = vcmask 1022976
    %v81 = vsel %vm80, %v77, %v79
    %v83 = vadd.f32 %v71, %v81
    %v84 = vmul.f32 %v44, -0.057657376
    %v85 = vmul.f32 %v45, -0.057657376
    %88 = vrot.lane.b32.xlu0 %v84, 124
    %v89 = vpop.permute.xlu0 %88
    %90 = vrot.lane.b32.xlu0 %v85, 124
    %v91 = vpop.permute.xlu0 %90
    %vm92 = vcmask 1014784
    %v93 = vsel %vm92, %v89, %v91
    %v95 = vadd.f32 %v83, %v93
    %v96 = vmul.f32 %v44, 0.009389464
    %v97 = vmul.f32 %v45, 0.009389464
    %100 = vrot.lane.b32.xlu0 %v96, 123
    %v101 = vpop.permute.xlu0 %100
    %102 = vrot.lane.b32.xlu0 %v97, 123
    %v103 = vpop.permute.xlu0 %102
    %vm104 = vcmask 1006592
    %v105 = vsel %vm104, %v101, %v103
    %v107 = vadd.f32 %v95, %v105
    %s108 = scalar_lea.vmem [#allocation2], 8
    %v109 = vld [vmem:[%s108] sm:$0xff]
    %s110 = scalar_lea.vmem [#allocation5], 8
    %v111 = vld [vmem:[%s110] sm:$0xff]
    %v112 = vmul.f32 %v109, 0.009389464
    %v113 = vadd.f32 %v107, %v112
    %v114 = vmul.f32 %v109, -0.057657376
    %v115 = vmul.f32 %v111, -0.057657376
    %118 = vrot.lane.b32.xlu0 %v114, 127
    %v119 = vpop.permute.xlu0 %118
    %120 = vrot.lane.b32.xlu0 %v115, 127
    %v121 = vpop.permute.xlu0 %120
    %v122 = vsel %vm56, %v119, %v121
    %v124 = vadd.f32 %v113, %v122
    %v125 = vmul.f32 %v109, 0.4432098
    %v126 = vmul.f32 %v111, 0.4432098
    %129 = vrot.lane.b32.xlu0 %v125, 126
    %v130 = vpop.permute.xlu0 %129
    %131 = vrot.lane.b32.xlu0 %v126, 126
    %v132 = vpop.permute.xlu0 %131
    %v133 = vsel %vm68, %v130, %v132
    %v135 = vadd.f32 %v124, %v133
    %v136 = vmul.f32 %v109, 0.12857261
    %v137 = vmul.f32 %v111, 0.12857261
    %140 = vrot.lane.b32.xlu0 %v136, 125
    %v141 = vpop.permute.xlu0 %140
    %142 = vrot.lane.b32.xlu0 %v137, 125
    %v143 = vpop.permute.xlu0 %142
    %v144 = vsel %vm80, %v141, %v143
    %v146 = vadd.f32 %v135, %v144
    %v147 = vmul.f32 %v109, -0.025543464
    %v148 = vmul.f32 %v111, -0.025543464
    %151 = vrot.lane.b32.xlu0 %v147, 124
    %v152 = vpop.permute.xlu0 %151
    %153 = vrot.lane.b32.xlu0 %v148, 124
    %v154 = vpop.permute.xlu0 %153
    %v155 = vsel %vm92, %v152, %v154
    %v157 = vadd.f32 %v146, %v155
    %v158 = vmul.f32 %v109, 0.0020289666
    %v159 = vmul.f32 %v111, 0.0020289666
    %162 = vrot.lane.b32.xlu0 %v158, 123
    %v163 = vpop.permute.xlu0 %162
    %164 = vrot.lane.b32.xlu0 %v159, 123
    %v165 = vpop.permute.xlu0 %164
    %v166 = vsel %vm104, %v163, %v165
    %v168 = vadd.f32 %v157, %v166
    %169 = vst [vmem:[#allocation7] sm:$0xff] %v168
    // Predicated region
    $region18: #{tpu_custom_call.1} parent=1 // pred_check
      _
    $region19: #{tpu_custom_call.1} parent=1 // pred_check_branch
      %171 = sbr.rel (0) target = $region21
    $region20: #{tpu_custom_call.1} parent=1 // pred_region
      %s173 = ssub.s32 128, 128
      %174 = vsyncadd [#allocation4], %s173
      %s176 = sshll.u32 [#allocation7], 4
      %s177 = int_to_ptr.vmem [resolvable:$true] %s176
      %179 = dma.vmem_to_hbm [thread:$0]  %s177, 128, %s2, [#allocation4]
    $region21: #{tpu_custom_call.1} parent=1 // pred_fallthru
      _
    // Predicated region
    $region22: #{tpu_custom_call.1} parent=1 // pred_check
      _
    $region23: #{tpu_custom_call.1} parent=1 // pred_check_branch
      %181 = sbr.rel (0) target = $region25
    $region24: #{tpu_custom_call.1} parent=1 // pred_region
      %182 = dma.done [#allocation4], 128
    $region25: #{tpu_custom_call.1} parent=1 // pred_fallthru
      _
    %183 = vsyncpa [#allocation3], 1
    %184 = vsyncpa [#allocation6], 1
    %185 = vsyncpa [#allocation4], 1

</llo_original>
